<compile_context>
chip_gen: v7x
topology: tpu7x:2x2x1
jax: 0.10.0
libtpu: 0.0.40
codegen_flags: <defaults>
</compile_context>

<pallas_src>
import functools

import jax
import jax.numpy as jnp
from jax import lax
from jax.experimental import pallas as pl
from jax.experimental.pallas import tpu as pltpu


def _fold_upsample_into_weight(weight_oihw, ratio):
    """Fold 'nearest-upsample(ratio) -> conv3x3(pad=1)' into one 3x3 conv applied to the
    original-resolution, zero-padded input, with ratio^2 * Cout output channels.

    Returns w_flat of shape (9*Cin, ratio^2*Cout) with
      row index = (u*3 + v)*Cin + ci          (u, v = tap position in the padded input)
      col index = (a*ratio + b)*Cout + co     (a, b = sub-pixel position)
    such that
      y[r*i+a, r*j+b, co] = sum_{u,v,ci} w_flat[(u*3+v)*Cin+ci, (a*r+b)*Cout+co]
                                          * x_pad[i+u, j+v, ci]
    """
    Cout, Cin, KH, KW = weight_oihw.shape
    assert (KH, KW) == (3, 3)
    w_hwio = jnp.transpose(weight_oihw, (2, 3, 1, 0))          # (3, 3, Cin, Cout)
    wc = jnp.zeros((3, 3, Cin, ratio, ratio, Cout), weight_oihw.dtype)
    for a in range(ratio):
        for b in range(ratio):
            for kh in range(3):
                for kw in range(3):
                    # Padded-original-input row/col this (kh, kw) tap reads for
                    # sub-pixel (a, b):  floor((a + kh - 1)/r) + 1  in {0, 1, 2}.
                    u = (a + kh - 1) // ratio + 1
                    v = (b + kw - 1) // ratio + 1
                    wc = wc.at[u, v, :, a, b, :].add(w_hwio[kh, kw])
    return wc.reshape(9 * Cin, ratio * ratio * Cout)


def _matmul_elu_kernel(p_ref, w_ref, o_ref):
    """Pure lane-dense matmul + ELU.

    p_ref : (TM, K_pad)     im2col patch rows (zero-padded K)
    w_ref : (K_pad, N_pad)  folded conv weight (zero-padded K and N)
    o_ref : (TM, N_pad)     output slab (padding columns stay 0: ELU(0) == 0)
    """
    acc = jnp.dot(p_ref[...], w_ref[...], preferred_element_type=jnp.float32)
    # ELU (alpha = 1): x if x > 0 else exp(x) - 1 (clamp exp argument for safety).
    out = jnp.where(acc > 0, acc, jnp.exp(jnp.minimum(acc, 0.0)) - 1.0)
    o_ref[...] = out.astype(o_ref.dtype)


def upconv_forward(x_nchw, weight_oihw, ratio=2):
    """Equivalent of upconv.forward: nearest-upsample(ratio) -> conv3x3(pad=1, no bias) -> ELU."""
    N, Cin, H, W = x_nchw.shape
    Cout = weight_oihw.shape[0]
    r2 = ratio * ratio

    K = 9 * Cin                       # im2col contraction dim
    NC = r2 * Cout                    # sub-pixel x Cout output columns
    K_pad = max(128, pl.cdiv(K, 128) * 128)
    N_pad = max(128, pl.cdiv(NC, 128) * 128)

    # --- wrapper-side layout plumbing (cheap at these sizes) --------------------------
    # Zero-pad + im2col at the ORIGINAL resolution; flatten batch into M.
    x_nhwc = jnp.transpose(x_nchw, (0, 2, 3, 1))                     # (N, H, W, Cin)
    xp = jnp.pad(x_nhwc, ((0, 0), (1, 1), (1, 1), (0, 0)))           # (N, H+2, W+2, Cin)
    taps = [xp[:, u:u + H, v:v + W, :] for u in range(3) for v in range(3)]
    patches = jnp.concatenate(taps, axis=-1).reshape(N * H * W, K)   # (M, 9*Cin)
    patches = jnp.pad(patches, ((0, 0), (0, K_pad - K)))             # lane-dense K

    w_flat = _fold_upsample_into_weight(weight_oihw, ratio)          # (9*Cin, r^2*Cout)
    w_pad = jnp.pad(w_flat, ((0, K_pad - K), (0, N_pad - NC))).astype(patches.dtype)

    # --- M tiling: fold batch into M; 2 parallel row tiles for v7x's two TCs ----------
    M = N * H * W
    if M >= 512 and M % 256 == 0:
        TM = 256
    else:
        TM = M
    assert M % TM == 0 and TM % 8 == 0, "row count must tile cleanly"
    grid = (M // TM,)

    cost = pl.CostEstimate(
        flops=2 * M * K_pad * N_pad,
        transcendentals=M * N_pad,
        bytes_accessed=4 * (M * K_pad + K_pad * N_pad + M * N_pad),
    )

    raw = pl.pallas_call(
        _matmul_elu_kernel,
        out_shape=jax.ShapeDtypeStruct((M, N_pad), x_nchw.dtype),
        grid=grid,
        in_specs=[
            pl.BlockSpec((TM, K_pad), lambda i: (i, 0)),
            pl.BlockSpec((K_pad, N_pad), lambda i: (0, 0)),
        ],
        out_specs=pl.BlockSpec((TM, N_pad), lambda i: (i, 0)),
        compiler_params=pltpu.CompilerParams(
            dimension_semantics=("parallel",),
        ),
        cost_estimate=cost,
    )(patches, w_pad)

    # Drop the padded columns, pixel-shuffle the r^2 sub-pixel channels back to space,
    # convert to NCHW (single transpose in the wrapper).
    out = raw[:, :NC].reshape(N, H, W, ratio, ratio, Cout)
    out = jnp.transpose(out, (0, 5, 1, 3, 2, 4))
    return out.reshape(N, Cout, H * ratio, W * ratio)


def upconv_reference(x_nchw, weight_oihw, ratio=2):
    """Pure-JAX reference: F.interpolate(nearest) -> Conv2d(3, stride=1, pad=1, no bias) -> ELU."""
    up = jnp.repeat(jnp.repeat(x_nchw, ratio, axis=2), ratio, axis=3)
    y = lax.conv_general_dilated(
        up, weight_oihw, window_strides=(1, 1), padding=((1, 1), (1, 1)),
        dimension_numbers=("NCHW", "OIHW", "NCHW"),
    )
    return jnp.where(y > 0, y, jnp.exp(jnp.minimum(y, 0.0)) - 1.0)


if __name__ == "__main__":
    # Small shapes consistent with the module: in_channels=4, out_channels=8, ratio=2.
    N, Cin, Cout, H, W, ratio = 2, 4, 8, 16, 16, 2

    key = jax.random.PRNGKey(0)
    kx, kw = jax.random.split(key)
    x = jax.random.normal(kx, (N, Cin, H, W), dtype=jnp.float32)
    # Deterministic synthetic conv weight, OIHW like nn.Conv2d.weight.
    weight = jax.random.normal(kw, (Cout, Cin, 3, 3), dtype=jnp.float32) * 0.1

    fwd = jax.jit(functools.partial(upconv_forward, ratio=ratio))
    out = jax.block_until_ready(fwd(x, weight))

    ref = upconv_reference(x, weight, ratio=ratio)
    assert out.shape == (N, Cout, H * ratio, W * ratio)
    assert jnp.allclose(out, ref, atol=1e-4, rtol=1e-5), "mismatch vs reference"

    print("KERNEL_OK")
</pallas_src>

<mosaic_0001>
module attributes {stable_mosaic.version = 11 : i64} {
  func.func @_matmul_elu_kernel(%arg0: i32, %arg1: memref<256x128xf32, #tpu.memory_space<vmem>>, %arg2: memref<128x128xf32, #tpu.memory_space<vmem>>, %arg3: memref<256x128xf32, #tpu.memory_space<vmem>>) attributes {dimension_semantics = [#tpu.dimension_semantics<parallel>], iteration_bounds = array<i64: 2>, scalar_prefetch = 0 : i64, scratch_operands = 0 : i64, tpu.core_type = #tpu.core_type<tc>, window_params = [{transform_indices = @transform_0, window_bounds = array<i64: 256, 128>}, {pipeline_mode = #tpu.pipeline_mode<synchronous>, transform_indices = @transform_1, window_bounds = array<i64: 128, 128>}, {transform_indices = @transform_2, window_bounds = array<i64: 256, 128>}]} {
    %c0 = arith.constant 0 : index
    %c0_0 = arith.constant 0 : index
    %0 = vector.load %arg1[%c0, %c0_0] : memref<256x128xf32, #tpu.memory_space<vmem>>, vector<256x128xf32>
    %c0_1 = arith.constant 0 : index
    %c0_2 = arith.constant 0 : index
    %1 = vector.load %arg2[%c0_1, %c0_2] : memref<128x128xf32, #tpu.memory_space<vmem>>, vector<128x128xf32>
    %cst = arith.constant dense<0.000000e+00> : vector<256x128xf32>
    %2 = tpu.matmul %0, %1, %cst {dimension_numbers = #tpu.dot_dimension_numbers<[1], [0], [0], [1], [0, 0, 1, 1], [], []>} : vector<256x128xf32>, vector<128x128xf32>, vector<256x128xf32> -> vector<256x128xf32>
    %cst_3 = arith.constant 0.000000e+00 : f32
    %3 = vector.broadcast %cst_3 : f32 to vector<256x128xf32>
    %4 = arith.cmpf ogt, %2, %3 : vector<256x128xf32>
    %cst_4 = arith.constant 0.000000e+00 : f32
    %5 = vector.broadcast %cst_4 : f32 to vector<256x128xf32>
    %6 = arith.minimumf %2, %5 : vector<256x128xf32>
    %7 = math.exp %6 : vector<256x128xf32>
    %cst_5 = arith.constant 1.000000e+00 : f32
    %8 = vector.broadcast %cst_5 : f32 to vector<256x128xf32>
    %9 = arith.subf %7, %8 : vector<256x128xf32>
    %10 = arith.select %4, %2, %9 : vector<256x128xi1>, vector<256x128xf32>
    %c0_6 = arith.constant 0 : index
    %c0_7 = arith.constant 0 : index
    %11 = vector.load %arg3[%c0_6, %c0_7] : memref<256x128xf32, #tpu.memory_space<vmem>>, vector<256x128xf32>
    tpu.vector_store %arg3[%c0_6, %c0_7], %10 {strides = array<i32>} : memref<256x128xf32, #tpu.memory_space<vmem>>, vector<256x128xf32>,
    return
  }
  func.func @transform_0(%arg0: i32) -> (i32, i32) {
    %c0_i32 = arith.constant 0 : i32
    %c0_i32_0 = arith.constant 0 : i32
    return %arg0, %c0_i32 : i32, i32
  }
  func.func @transform_1(%arg0: i32) -> (i32, i32) {
    %c0_i32 = arith.constant 0 : i32
    %c0_i32_0 = arith.constant 0 : i32
    %c0_i32_1 = arith.constant 0 : i32
    return %c0_i32, %c0_i32_0 : i32, i32
  }
  func.func @transform_2(%arg0: i32) -> (i32, i32) {
    %c0_i32 = arith.constant 0 : i32
    %c0_i32_0 = arith.constant 0 : i32
    return %arg0, %c0_i32 : i32, i32
  }
}

</mosaic_0001>

<llo_original>
// kernel: upconv_forward.1
$region0: #{upconv_forward.1}
  #allocation0 [shape = 'u32[]', space=smem, size = 0x4, offset = 0x4, fixed_abs, tag = 'smem constant byte address 0x4 - core index']
  #allocation1 [shape = 'u32[144,128]{1,0:T(1,128)}', space=vmem, size = 0x12000, scoped, tag = 'internal scratch']
  %s0 = inlined_call_operand.vmem [shape: f32[512,128], index: 0, kind: input, shape index: {}]
  %s1 = inlined_call_operand.vmem [shape: f32[128,128], index: 1, kind: input, shape index: {}]
  %s2 = inlined_call_operand.vmem [shape: f32[512,128], index: 2, kind: output, shape index: {}]
  %s3 = sld [smem:[#allocation0]]
  $region41: #{upconv_forward.1} parent=0
    _
  %s5 = ssub.s32 1, %s3
  %s6 = scalar_select 0, %s5, %s3
  loop: start=0, step=1, limit=4
  $region2: #{upconv_forward.1} parent=0 // loop_pre_header
    _
  $region3: #{upconv_forward.1} parent=0 // loop_header
    %s8 = sphi 0, %s12
    %p9 = scmp.ge.s32.totalorder %s8, 4
    %s18 = sphi 0, %s20
    %s21 = sphi 0, %s18
    %s22 = sphi 0, %s21
    %s38 = sphi 0, %s22
    %s42 = sphi 0, %s42
    %s44 = sphi 0, %s42
    %s45 = sphi 0, %s44
    %s59 = sphi 0, %s45
    %s65 = sphi 0, %s67
    %s68 = sphi 0, %s65
    %s69 = sphi 0, %s68
    %s85 = sphi 0, %s69
  $region4: #{upconv_forward.1} parent=0 // loop_header_branch
    %11 = sbr.rel (%p9) target = $region8
  $region5: #{upconv_forward.1} parent=0 // loop_body
    %s13 = ssub.s32 %s8, 1
    %s14 = ssub.s32 %s8, 2
    %s15 = sadd.s32 %s8, 1
    %s16 = ssub.s32 %s8, %s15
    %p17 = scmp.eq.s32.totalorder %s16, 0
    %s19 = sadd.s32 %s18, 1
    %s20 = scalar_select %p17, %s18, %s19
    %p23 = pneg %p17
    %p24 = scmp.eq.s32.totalorder %s8, 1
    %p25 = por %p23, %p24
    %p26 = scmp.ne.s32.totalorder %s18, %s21
    %p27 = scmp.eq.s32.totalorder %s8, 0
    %p28 = por %p26, %p27
    %p29 = scmp.ne.s32.totalorder %s18, %s21
    %p30 = scmp.eq.s32.totalorder %s13, 1
    %p31 = por %p29, %p30
    %p32 = scmp.ne.s32.totalorder %s21, %s22
    %p33 = scmp.eq.s32.totalorder %s13, 0
    %p34 = por %p32, %p33
    %p35 = scmp.ne.s32.totalorder %s21, %s22
    %p36 = scmp.eq.s32.totalorder %s14, 1
    %p37 = por %p35, %p36
    %p39 = scmp.ne.s32.totalorder %s22, %s38
    %p40 = scmp.eq.s32.totalorder %s14, 0
    %p41 = por %p39, %p40
    %s43 = sadd.s32 %s42, 1
    %p46 = scmp.eq.s32.totalorder %s8, 1
    %p47 = scmp.ne.s32.totalorder %s42, %s44
    %p48 = scmp.eq.s32.totalorder %s8, 0
    %p49 = por %p47, %p48
    %p50 = scmp.ne.s32.totalorder %s42, %s44
    %p51 = scmp.eq.s32.totalorder %s13, 1
    %p52 = por %p50, %p51
    %p53 = scmp.ne.s32.totalorder %s44, %s45
    %p54 = scmp.eq.s32.totalorder %s13, 0
    %p55 = por %p53, %p54
    %p56 = scmp.ne.s32.totalorder %s44, %s45
    %p57 = scmp.eq.s32.totalorder %s14, 1
    %p58 = por %p56, %p57
    %p60 = scmp.ne.s32.totalorder %s45, %s59
    %p61 = scmp.eq.s32.totalorder %s14, 0
    %p62 = por %p60, %p61
    %s63 = ssub.s32 %s8, %s15
    %p64 = scmp.eq.s32.totalorder %s63, 0
    %s66 = sadd.s32 %s65, 1
    %s67 = scalar_select %p64, %s65, %s66
    %p70 = pneg %p64
    %p71 = scmp.eq.s32.totalorder %s8, 1
    %p72 = por %p70, %p71
    %p73 = scmp.ne.s32.totalorder %s65, %s68
    %p74 = scmp.eq.s32.totalorder %s8, 0
    %p75 = por %p73, %p74
    %p76 = scmp.ne.s32.totalorder %s65, %s68
    %p77 = scmp.eq.s32.totalorder %s13, 1
    %p78 = por %p76, %p77
    %p79 = scmp.ne.s32.totalorder %s68, %s69
    %p80 = scmp.eq.s32.totalorder %s13, 0
    %p81 = por %p79, %p80
    %p82 = scmp.ne.s32.totalorder %s68, %s69
    %p83 = scmp.eq.s32.totalorder %s14, 1
    %p84 = por %p82, %p83
    %p86 = scmp.ne.s32.totalorder %s69, %s85
    %p87 = scmp.eq.s32.totalorder %s14, 0
    %p88 = por %p86, %p87
    %p89 = scmp.le.s32.totalorder 1, %s8
    %p90 = scmp.lt.s32.totalorder %s8, 3
    %p91 = pnand %p89, %p90
    %p92 = pneg %p91
    // Predicated region
    $region9: #{upconv_forward.1} parent=5 // pred_check
      _
    $region10: #{upconv_forward.1} parent=5 // pred_check_branch
      %94 = sbr.rel (%p91) target = $region12
    $region11: #{upconv_forward.1} parent=5 // pred_region
      %s95 = ssub.s32 %s8, 1
      // Predicated region
      $region13: #{upconv_forward.1} parent=11 // pred_check
        %p96 = pneg %p55
      $region14: #{upconv_forward.1} parent=11 // pred_check_branch
        %98 = sbr.rel (%p96) target = $region16
      $region15: #{upconv_forward.1} parent=11 // pred_region
        _
      $region16: #{upconv_forward.1} parent=11 // pred_fallthru
        _
    $region12: #{upconv_forward.1} parent=5 // pred_fallthru
      _
    %p99 = scmp.lt.s32.totalorder %s8, 2
    // Predicated region
    $region17: #{upconv_forward.1} parent=5 // pred_check
      %p100 = pneg %p99
    $region18: #{upconv_forward.1} parent=5 // pred_check_branch
      %102 = sbr.rel (%p100) target = $region20
    $region19: #{upconv_forward.1} parent=5 // pred_region
      // Predicated region
      $region21: #{upconv_forward.1} parent=19 // pred_check
        %p103 = pneg %p28
      $region22: #{upconv_forward.1} parent=19 // pred_check_branch
        %105 = sbr.rel (%p103) target = $region24
      $region23: #{upconv_forward.1} parent=19 // pred_region
        %s106 = smul.u32 32, %s8
        %p107 = scmp.lt.s32.totalorder %s106, 63
        %s108 = scalar_select %p107, %s106, 63
        %s109 = smul.addr %s108, 8
        %s110 = scalar_lea.vmem %s0, %s109
        %s111 = smul.u32 32, %s8
      $region24: #{upconv_forward.1} parent=19 // pred_fallthru
        _
    $region20: #{upconv_forward.1} parent=5 // pred_fallthru
      _
    %p112 = scmp.le.s32.totalorder 1, %s8
    %p113 = scmp.lt.s32.totalorder %s8, 3
    %p114 = pnand %p112, %p113
    %p115 = pneg %p114
    // Predicated region
    $region25: #{upconv_forward.1} parent=5 // pred_check
      _
    $region26: #{upconv_forward.1} parent=5 // pred_check_branch
      %117 = sbr.rel (%p114) target = $region28
    $region27: #{upconv_forward.1} parent=5 // pred_region
      %s118 = ssub.s32 %s8, 1
      %s119 = smul.u32 32, %s13
      %p120 = scmp.lt.s32.totalorder %s119, 63
      %s121 = scalar_select %p120, %s119, 63
      %s122 = smul.addr %s121, 8
      %s123 = scalar_lea.vmem %s0, %s122
      %p124 = pneg %p34
      %p125 = pneg %p31
      %p126 = pneg %p55
      %p127 = pneg %p52
      %p128 = pneg %p81
      %p129 = pneg %p78
      %s130 = smul.u32 32, %s13
      %p131 = scmp.lt.s32.totalorder %s130, 63
      %s132 = scalar_select %p131, %s130, 63
      %s133 = smul.addr %s132, 8
      %s134 = scalar_lea.vmem %s2, %s133
      %s135 = smul.u32 32, %s13
      %p136 = scmp.lt.s32.totalorder %s135, 63
      %s137 = scalar_select %p136, %s135, 63
      %s138 = smul.addr %s137, 8
      %s139 = scalar_lea.vmem %s0, %s138
      %s140 = smul.u32 32, %s13
      %s141 = smul.u32 32, %s13
      %p142 = scmp.lt.s32.totalorder %s141, 63
      %s143 = scalar_select %p142, %s141, 63
      %s144 = smul.addr %s143, 8
      %s145 = scalar_lea.vmem %s2, %s144
      %s146 = smul.u32 32, %s13
      %v147 = vld [vmem:[%s139] sm:$0xff]
      %v148 = vld [vmem:[%s139 + $0x8] sm:$0xff]
      %v149 = vld [vmem:[%s139 + $0x10] sm:$0xff]
      %v150 = vld [vmem:[%s139 + $0x18] sm:$0xff]
      %v151 = vld [vmem:[%s139 + $0x20] sm:$0xff]
      %v152 = vld [vmem:[%s139 + $0x28] sm:$0xff]
      %v153 = vld [vmem:[%s139 + $0x30] sm:$0xff]
      %v154 = vld [vmem:[%s139 + $0x38] sm:$0xff]
      %v155 = vld [vmem:[%s139 + $0x40] sm:$0xff]
      %v156 = vld [vmem:[%s139 + $0x48] sm:$0xff]
      %v157 = vld [vmem:[%s139 + $0x50] sm:$0xff]
      %v158 = vld [vmem:[%s139 + $0x58] sm:$0xff]
      %v159 = vld [vmem:[%s139 + $0x60] sm:$0xff]
      %v160 = vld [vmem:[%s139 + $0x68] sm:$0xff]
      %v161 = vld [vmem:[%s139 + $0x70] sm:$0xff]
      %v162 = vld [vmem:[%s139 + $0x78] sm:$0xff]
      %v163 = vld [vmem:[%s139 + $0x80] sm:$0xff]
      %v164 = vld [vmem:[%s139 + $0x88] sm:$0xff]
      %v165 = vld [vmem:[%s139 + $0x90] sm:$0xff]
      %v166 = vld [vmem:[%s139 + $0x98] sm:$0xff]
      %v167 = vld [vmem:[%s139 + $0xa0] sm:$0xff]
      %v168 = vld [vmem:[%s139 + $0xa8] sm:$0xff]
      %v169 = vld [vmem:[%s139 + $0xb0] sm:$0xff]
      %v170 = vld [vmem:[%s139 + $0xb8] sm:$0xff]
      %v171 = vld [vmem:[%s139 + $0xc0] sm:$0xff]
      %v172 = vld [vmem:[%s139 + $0xc8] sm:$0xff]
      %v173 = vld [vmem:[%s139 + $0xd0] sm:$0xff]
      %v174 = vld [vmem:[%s139 + $0xd8] sm:$0xff]
      %v175 = vld [vmem:[%s139 + $0xe0] sm:$0xff]
      %v176 = vld [vmem:[%s139 + $0xe8] sm:$0xff]
      %v177 = vld [vmem:[%s139 + $0xf0] sm:$0xff]
      %v178 = vld [vmem:[%s139 + $0xf8] sm:$0xff]
      %v179 = vld [vmem:[%s1] sm:$0xff]
      %v180 = vld [vmem:[%s1 + $0x8] sm:$0xff]
      %v181 = vld [vmem:[%s1 + $0x10] sm:$0xff]
      %v182 = vld [vmem:[%s1 + $0x18] sm:$0xff]
      %v183 = vld [vmem:[%s1 + $0x20] sm:$0xff]
      %v184 = vld [vmem:[%s1 + $0x28] sm:$0xff]
      %v185 = vld [vmem:[%s1 + $0x30] sm:$0xff]
      %v186 = vld [vmem:[%s1 + $0x38] sm:$0xff]
      %v187 = vld [vmem:[%s1 + $0x40] sm:$0xff]
      %v188 = vld [vmem:[%s1 + $0x48] sm:$0xff]
      %v189 = vld [vmem:[%s1 + $0x50] sm:$0xff]
      %v190 = vld [vmem:[%s1 + $0x58] sm:$0xff]
      %v191 = vld [vmem:[%s1 + $0x60] sm:$0xff]
      %v192 = vld [vmem:[%s1 + $0x68] sm:$0xff]
      %v193 = vld [vmem:[%s1 + $0x70] sm:$0xff]
      %v194 = vld [vmem:[%s1 + $0x78] sm:$0xff]
      %195 = vmatprep.subr.mxu0 0.0
      %196 = vmatpush1.msra.mxu0 %v179
      %197 = vmatprep.subr.mxu0 0.0
      %198 = vmatpush1.msra.mxu0 %v180
      %199 = vmatprep.subr.mxu0 0.0
      %200 = vmatpush1.msra.mxu0 %v181
      %201 = vmatprep.subr.mxu0 0.0
      %202 = vmatpush1.msra.mxu0 %v182
      %203 = vmatprep.subr.mxu0 0.0
      %204 = vmatpush1.msra.mxu0 %v183
      %205 = vmatprep.subr.mxu0 0.0
      %206 = vmatpush1.msra.mxu0 %v184
      %207 = vmatprep.subr.mxu0 0.0
      %208 = vmatpush1.msra.mxu0 %v185
      %209 = vmatprep.subr.mxu0 0.0
      %210 = vmatpush1.msra.mxu0 %v186
      %211 = vmatprep.subr.mxu0 0.0
      %212 = vmatpush1.msra.mxu0 %v187
      %213 = vmatprep.subr.mxu0 0.0
      %214 = vmatpush1.msra.mxu0 %v188
      %215 = vmatprep.subr.mxu0 0.0
      %216 = vmatpush1.msra.mxu0 %v189
      %217 = vmatprep.subr.mxu0 0.0
      %218 = vmatpush1.msra.mxu0 %v190
      %219 = vmatprep.subr.mxu0 0.0
      %220 = vmatpush1.msra.mxu0 %v191
      %221 = vmatprep.subr.mxu0 0.0
      %222 = vmatpush1.msra.mxu0 %v192
      %223 = vmatprep.subr.mxu0 0.0
      %224 = vmatpush1.msra.mxu0 %v193
      %225 = vmatprep.subr.mxu0 0.0
      %226 = vmatpush1.msra.mxu0 %v194
      %227 = vmatprep.subr.mxu0 0.0
      %228 = vmatpush1.msra.mxu0 0.0
      %229 = vmatprep.subr.mxu0 0.0
      %230 = vmatpush1.msra.mxu0 0.0
      %231 = vmatprep.subr.mxu0 0.0
      %232 = vmatpush1.msra.mxu0 0.0
      %233 = vmatprep.subr.mxu0 0.0
      %234 = vmatpush1.msra.mxu0 0.0
      %235 = vmatprep.subr.mxu0 0.0
      %236 = vmatpush1.msra.mxu0 0.0
      %237 = vmatprep.subr.mxu0 0.0
      %238 = vmatpush1.msra.mxu0 0.0
      %239 = vmatprep.subr.mxu0 0.0
      %240 = vmatpush1.msra.mxu0 0.0
      %241 = vmatprep.subr.mxu0 0.0
      %242 = vmatpush1.msra.mxu0 0.0
      %243 = vmatprep.subr.mxu0 0.0
      %244 = vmatpush1.msra.mxu0 0.0
      %245 = vmatprep.subr.mxu0 0.0
      %246 = vmatpush1.msra.mxu0 0.0
      %247 = vmatprep.subr.mxu0 0.0
      %248 = vmatpush1.msra.mxu0 0.0
      %249 = vmatprep.subr.mxu0 0.0
      %250 = vmatpush1.msra.mxu0 0.0
      %251 = vmatprep.subr.mxu0 0.0
      %252 = vmatpush1.msra.mxu0 0.0
      %253 = vmatprep.subr.mxu0 0.0
      %254 = vmatpush1.msra.mxu0 0.0
      %255 = vmatprep.subr.mxu0 0.0
      %256 = vmatpush1.msra.mxu0 0.0
      %257 = vmatprep.subr.mxu0 0.0
      %258 = vmatpush1.msra.mxu0 0.0
      %259 = vmatprep.mubr.f32.mxu0 0.0
      %260 = vmatmul.mubr.f32.gmra.mrb[0].mxu0 %v147
      %v261 = vpop.f32.mrb[0].mxu0
      %v262 = vadd.f32 0.0, %v261
      %v263 = vpop.f32.mrb[0].mxu0
      %264 = vmatprep.mubr.f32.mxu0 0.0
      %265 = vmatmul.mubr.f32.gmra.mrb[0].mxu0 %v148
      %v266 = vpop.f32.mrb[0].mxu0
      %v267 = vadd.f32 0.0, %v266
      %v268 = vpop.f32.mrb[0].mxu0
      %269 = vmatprep.mubr.f32.mxu0 0.0
      %270 = vmatmul.mubr.f32.gmra.mrb[0].mxu0 %v149
      %v271 = vpop.f32.mrb[0].mxu0
      %v272 = vadd.f32 0.0, %v271
      %v273 = vpop.f32.mrb[0].mxu0
      %274 = vmatprep.mubr.f32.mxu0 0.0
      %275 = vmatmul.mubr.f32.gmra.mrb[0].mxu0 %v150
      %v276 = vpop.f32.mrb[0].mxu0
      %v277 = vadd.f32 0.0, %v276
      %v278 = vpop.f32.mrb[0].mxu0
      %279 = vmatprep.mubr.f32.mxu0 0.0
      %280 = vmatmul.mubr.f32.gmra.mrb[0].mxu0 %v151
      %v281 = vpop.f32.mrb[0].mxu0
      %v282 = vadd.f32 0.0, %v281
      %v283 = vpop.f32.mrb[0].mxu0
      %284 = vmatprep.mubr.f32.mxu0 0.0
      %285 = vmatmul.mubr.f32.gmra.mrb[0].mxu0 %v152
      %v286 = vpop.f32.mrb[0].mxu0
      %v287 = vadd.f32 0.0, %v286
      %v288 = vpop.f32.mrb[0].mxu0
      %289 = vmatprep.mubr.f32.mxu0 0.0
      %290 = vmatmul.mubr.f32.gmra.mrb[0].mxu0 %v153
      %v291 = vpop.f32.mrb[0].mxu0
      %v292 = vadd.f32 0.0, %v291
      %v293 = vpop.f32.mrb[0].mxu0
      %294 = vmatprep.mubr.f32.mxu0 0.0
      %295 = vmatmul.mubr.f32.gmra.mrb[0].mxu0 %v154
      %v296 = vpop.f32.mrb[0].mxu0
      %v297 = vadd.f32 0.0, %v296
      %v298 = vpop.f32.mrb[0].mxu0
      %299 = vmatprep.mubr.f32.mxu0 0.0
      %300 = vmatmul.mubr.f32.gmra.mrb[0].mxu0 %v155
      %v301 = vpop.f32.mrb[0].mxu0
      %v302 = vadd.f32 0.0, %v301
      %v303 = vpop.f32.mrb[0].mxu0
      %304 = vmatprep.mubr.f32.mxu0 0.0
      %305 = vmatmul.mubr.f32.gmra.mrb[0].mxu0 %v156
      %v306 = vpop.f32.mrb[0].mxu0
      %v307 = vadd.f32 0.0, %v306
      %v308 = vpop.f32.mrb[0].mxu0
      %309 = vmatprep.mubr.f32.mxu0 0.0
      %310 = vmatmul.mubr.f32.gmra.mrb[0].mxu0 %v157
      %v311 = vpop.f32.mrb[0].mxu0
      %v312 = vadd.f32 0.0, %v311
      %v313 = vpop.f32.mrb[0].mxu0
      %314 = vmatprep.mubr.f32.mxu0 0.0
      %315 = vmatmul.mubr.f32.gmra.mrb[0].mxu0 %v158
      %v316 = vpop.f32.mrb[0].mxu0
      %v317 = vadd.f32 0.0, %v316
      %v318 = vpop.f32.mrb[0].mxu0
      %319 = vmatprep.mubr.f32.mxu0 0.0
      %320 = vmatmul.mubr.f32.gmra.mrb[0].mxu0 %v159
      %v321 = vpop.f32.mrb[0].mxu0
      %v322 = vadd.f32 0.0, %v321
      %v323 = vpop.f32.mrb[0].mxu0
      %324 = vmatprep.mubr.f32.mxu0 0.0
      %325 = vmatmul.mubr.f32.gmra.mrb[0].mxu0 %v160
      %v326 = vpop.f32.mrb[0].mxu0
      %v327 = vadd.f32 0.0, %v326
      %v328 = vpop.f32.mrb[0].mxu0
      %329 = vmatprep.mubr.f32.mxu0 0.0
      %330 = vmatmul.mubr.f32.gmra.mrb[0].mxu0 %v161
      %v331 = vpop.f32.mrb[0].mxu0
      %v332 = vadd.f32 0.0, %v331
      %v333 = vpop.f32.mrb[0].mxu0
      %334 = vmatprep.mubr.f32.mxu0 0.0
      %335 = vmatmul.mubr.f32.gmra.mrb[0].mxu0 %v162
      %v336 = vpop.f32.mrb[0].mxu0
      %v337 = vadd.f32 0.0, %v336
      %v338 = vpop.f32.mrb[0].mxu0
      %339 = vmatprep.mubr.f32.mxu0 0.0
      %340 = vmatmul.mubr.f32.gmra.mrb[0].mxu0 %v163
      %v341 = vpop.f32.mrb[0].mxu0
      %v342 = vadd.f32 0.0, %v341
      %v343 = vpop.f32.mrb[0].mxu0
      %344 = vmatprep.mubr.f32.mxu0 0.0
      %345 = vmatmul.mubr.f32.gmra.mrb[0].mxu0 %v164
      %v346 = vpop.f32.mrb[0].mxu0
      %v347 = vadd.f32 0.0, %v346
      %v348 = vpop.f32.mrb[0].mxu0
      %349 = vmatprep.mubr.f32.mxu0 0.0
      %350 = vmatmul.mubr.f32.gmra.mrb[0].mxu0 %v165
      %v351 = vpop.f32.mrb[0].mxu0
      %v352 = vadd.f32 0.0, %v351
      %v353 = vpop.f32.mrb[0].mxu0
      %354 = vmatprep.mubr.f32.mxu0 0.0
      %355 = vmatmul.mubr.f32.gmra.mrb[0].mxu0 %v166
      %v356 = vpop.f32.mrb[0].mxu0
      %v357 = vadd.f32 0.0, %v356
      %v358 = vpop.f32.mrb[0].mxu0
      %359 = vmatprep.mubr.f32.mxu0 0.0
      %360 = vmatmul.mubr.f32.gmra.mrb[0].mxu0 %v167
      %v361 = vpop.f32.mrb[0].mxu0
      %v362 = vadd.f32 0.0, %v361
      %v363 = vpop.f32.mrb[0].mxu0
      %364 = vmatprep.mubr.f32.mxu0 0.0
      %365 = vmatmul.mubr.f32.gmra.mrb[0].mxu0 %v168
      %v366 = vpop.f32.mrb[0].mxu0
      %v367 = vadd.f32 0.0, %v366
      %v368 = vpop.f32.mrb[0].mxu0
      %369 = vmatprep.mubr.f32.mxu0 0.0
      %370 = vmatmul.mubr.f32.gmra.mrb[0].mxu0 %v169
      %v371 = vpop.f32.mrb[0].mxu0
      %v372 = vadd.f32 0.0, %v371
      %v373 = vpop.f32.mrb[0].mxu0
      %374 = vmatprep.mubr.f32.mxu0 0.0
      %375 = vmatmul.mubr.f32.gmra.mrb[0].mxu0 %v170
      %v376 = vpop.f32.mrb[0].mxu0
      %v377 = vadd.f32 0.0, %v376
      %v378 = vpop.f32.mrb[0].mxu0
      %379 = vmatprep.mubr.f32.mxu0 0.0
      %380 = vmatmul.mubr.f32.gmra.mrb[0].mxu0 %v171
      %v381 = vpop.f32.mrb[0].mxu0
      %v382 = vadd.f32 0.0, %v381
      %v383 = vpop.f32.mrb[0].mxu0
      %384 = vmatprep.mubr.f32.mxu0 0.0
      %385 = vmatmul.mubr.f32.gmra.mrb[0].mxu0 %v172
      %v386 = vpop.f32.mrb[0].mxu0
      %v387 = vadd.f32 0.0, %v386
      %v388 = vpop.f32.mrb[0].mxu0
      %389 = vmatprep.mubr.f32.mxu0 0.0
      %390 = vmatmul.mubr.f32.gmra.mrb[0].mxu0 %v173
      %v391 = vpop.f32.mrb[0].mxu0
      %v392 = vadd.f32 0.0, %v391
      %v393 = vpop.f32.mrb[0].mxu0
      %394 = vmatprep.mubr.f32.mxu0 0.0
      %395 = vmatmul.mubr.f32.gmra.mrb[0].mxu0 %v174
      %v396 = vpop.f32.mrb[0].mxu0
      %v397 = vadd.f32 0.0, %v396
      %v398 = vpop.f32.mrb[0].mxu0
      %399 = vmatprep.mubr.f32.mxu0 0.0
      %400 = vmatmul.mubr.f32.gmra.mrb[0].mxu0 %v175
      %v401 = vpop.f32.mrb[0].mxu0
      %v402 = vadd.f32 0.0, %v401
      %v403 = vpop.f32.mrb[0].mxu0
      %404 = vmatprep.mubr.f32.mxu0 0.0
      %405 = vmatmul.mubr.f32.gmra.mrb[0].mxu0 %v176
      %v406 = vpop.f32.mrb[0].mxu0
      %v407 = vadd.f32 0.0, %v406
      %v408 = vpop.f32.mrb[0].mxu0
      %409 = vmatprep.mubr.f32.mxu0 0.0
      %410 = vmatmul.mubr.f32.gmra.mrb[0].mxu0 %v177
      %v411 = vpop.f32.mrb[0].mxu0
      %v412 = vadd.f32 0.0, %v411
      %v413 = vpop.f32.mrb[0].mxu0
      %414 = vmatprep.mubr.f32.mxu0 0.0
      %415 = vmatmul.mubr.f32.gmra.mrb[0].mxu0 %v178
      %v416 = vpop.f32.mrb[0].mxu0
      %v417 = vadd.f32 0.0, %v416
      %v418 = vpop.f32.mrb[0].mxu0
      %419 = vdwg.mxu0
      %vm420 = vcmp.gt.f32.partialorder %v262, 0.0
      %vm421 = vcmp.gt.f32.partialorder %v267, 0.0
      %vm422 = vcmp.gt.f32.partialorder %v272, 0.0
      %vm423 = vcmp.gt.f32.partialorder %v277, 0.0
      %vm424 = vcmp.gt.f32.partialorder %v282, 0.0
      %vm425 = vcmp.gt.f32.partialorder %v287, 0.0
      %vm426 = vcmp.gt.f32.partialorder %v292, 0.0
      %vm427 = vcmp.gt.f32.partialorder %v297, 0.0
      %vm428 = vcmp.gt.f32.partialorder %v302, 0.0
      %vm429 = vcmp.gt.f32.partialorder %v307, 0.0
      %vm430 = vcmp.gt.f32.partialorder %v312, 0.0
      %vm431 = vcmp.gt.f32.partialorder %v317, 0.0
      %vm432 = vcmp.gt.f32.partialorder %v322, 0.0
      %vm433 = vcmp.gt.f32.partialorder %v327, 0.0
      %vm434 = vcmp.gt.f32.partialorder %v332, 0.0
      %vm435 = vcmp.gt.f32.partialorder %v337, 0.0
      %vm436 = vcmp.gt.f32.partialorder %v342, 0.0
      %vm437 = vcmp.gt.f32.partialorder %v347, 0.0
      %vm438 = vcmp.gt.f32.partialorder %v352, 0.0
      %vm439 = vcmp.gt.f32.partialorder %v357, 0.0
      %vm440 = vcmp.gt.f32.partialorder %v362, 0.0
      %vm441 = vcmp.gt.f32.partialorder %v367, 0.0
      %vm442 = vcmp.gt.f32.partialorder %v372, 0.0
      %vm443 = vcmp.gt.f32.partialorder %v377, 0.0
      %vm444 = vcmp.gt.f32.partialorder %v382, 0.0
      %vm445 = vcmp.gt.f32.partialorder %v387, 0.0
      %vm446 = vcmp.gt.f32.partialorder %v392, 0.0
      %vm447 = vcmp.gt.f32.partialorder %v397, 0.0
      %vm448 = vcmp.gt.f32.partialorder %v402, 0.0
      %vm449 = vcmp.gt.f32.partialorder %v407, 0.0
      %vm450 = vcmp.gt.f32.partialorder %v412, 0.0
      %vm451 = vcmp.gt.f32.partialorder %v417, 0.0
      %v452 = vmin.f32 %v262, 0.0
      %v453 = vmin.f32 %v267, 0.0
      %v454 = vmin.f32 %v272, 0.0
      %v455 = vmin.f32 %v277, 0.0
      %v456 = vmin.f32 %v282, 0.0
      %v457 = vmin.f32 %v287, 0.0
      %v458 = vmin.f32 %v292, 0.0
      %v459 = vmin.f32 %v297, 0.0
      %v460 = vmin.f32 %v302, 0.0
      %v461 = vmin.f32 %v307, 0.0
      %v462 = vmin.f32 %v312, 0.0
      %v463 = vmin.f32 %v317, 0.0
      %v464 = vmin.f32 %v322, 0.0
      %v465 = vmin.f32 %v327, 0.0
      %v466 = vmin.f32 %v332, 0.0
      %v467 = vmin.f32 %v337, 0.0
      %v468 = vmin.f32 %v342, 0.0
      %v469 = vmin.f32 %v347, 0.0
      %v470 = vmin.f32 %v352, 0.0
      %v471 = vmin.f32 %v357, 0.0
      %v472 = vmin.f32 %v362, 0.0
      %v473 = vmin.f32 %v367, 0.0
      %v474 = vmin.f32 %v372, 0.0
      %v475 = vmin.f32 %v377, 0.0
      %v476 = vmin.f32 %v382, 0.0
      %v477 = vmin.f32 %v387, 0.0
      %v478 = vmin.f32 %v392, 0.0
      %v479 = vmin.f32 %v397, 0.0
      %v480 = vmin.f32 %v402, 0.0
      %v481 = vmin.f32 %v407, 0.0
      %v482 = vmin.f32 %v412, 0.0
      %v483 = vmin.f32 %v417, 0.0
      %v484 = vmul.f32 %v452, 1.442695
      %v485 = vpow.pop %v484
      %v486 = vmul.f32 %v453, 1.442695
      %v487 = vpow.pop %v486
      %v488 = vmul.f32 %v454, 1.442695
      %v489 = vpow.pop %v488
      %v490 = vmul.f32 %v455, 1.442695
      %v491 = vpow.pop %v490
      %v492 = vmul.f32 %v456, 1.442695
      %v493 = vpow.pop %v492
      %v494 = vmul.f32 %v457, 1.442695
      %v495 = vpow.pop %v494
      %v496 = vmul.f32 %v458, 1.442695
      %v497 = vpow.pop %v496
      %v498 = vmul.f32 %v459, 1.442695
      %v499 = vpow.pop %v498
      %v500 = vmul.f32 %v460, 1.442695
      %v501 = vpow.pop %v500
      %v502 = vmul.f32 %v461, 1.442695
      %v503 = vpow.pop %v502
      %v504 = vmul.f32 %v462, 1.442695
      %v505 = vpow.pop %v504
      %v506 = vmul.f32 %v463, 1.442695
      %v507 = vpow.pop %v506
      %v508 = vmul.f32 %v464, 1.442695
      %v509 = vpow.pop %v508
      %v510 = vmul.f32 %v465, 1.442695
      %v511 = vpow.pop %v510
      %v512 = vmul.f32 %v466, 1.442695
      %v513 = vpow.pop %v512
      %v514 = vmul.f32 %v467, 1.442695
      %v515 = vpow.pop %v514
      %v516 = vmul.f32 %v468, 1.442695
      %v517 = vpow.pop %v516
      %v518 = vmul.f32 %v469, 1.442695
      %v519 = vpow.pop %v518
      %v520 = vmul.f32 %v470, 1.442695
      %v521 = vpow.pop %v520
      %v522 = vmul.f32 %v471, 1.442695
      %v523 = vpow.pop %v522
      %v524 = vmul.f32 %v472, 1.442695
      %v525 = vpow.pop %v524
      %v526 = vmul.f32 %v473, 1.442695
      %v527 = vpow.pop %v526
      %v528 = vmul.f32 %v474, 1.442695
      %v529 = vpow.pop %v528
      %v530 = vmul.f32 %v475, 1.442695
      %v531 = vpow.pop %v530
      %v532 = vmul.f32 %v476, 1.442695
      %v533 = vpow.pop %v532
      %v534 = vmul.f32 %v477, 1.442695
      %v535 = vpow.pop %v534
      %v536 = vmul.f32 %v478, 1.442695
      %v537 = vpow.pop %v536
      %v538 = vmul.f32 %v479, 1.442695
      %v539 = vpow.pop %v538
      %v540 = vmul.f32 %v480, 1.442695
      %v541 = vpow.pop %v540
      %v542 = vmul.f32 %v481, 1.442695
      %v543 = vpow.pop %v542
      %v544 = vmul.f32 %v482, 1.442695
      %v545 = vpow.pop %v544
      %v546 = vmul.f32 %v483, 1.442695
      %v547 = vpow.pop %v546
      %v548 = vsub.f32 %v485, 1.0
      %v549 = vsub.f32 %v487, 1.0
      %v550 = vsub.f32 %v489, 1.0
      %v551 = vsub.f32 %v491, 1.0
      %v552 = vsub.f32 %v493, 1.0
      %v553 = vsub.f32 %v495, 1.0
      %v554 = vsub.f32 %v497, 1.0
      %v555 = vsub.f32 %v499, 1.0
      %v556 = vsub.f32 %v501, 1.0
      %v557 = vsub.f32 %v503, 1.0
      %v558 = vsub.f32 %v505, 1.0
      %v559 = vsub.f32 %v507, 1.0
      %v560 = vsub.f32 %v509, 1.0
      %v561 = vsub.f32 %v511, 1.0
      %v562 = vsub.f32 %v513, 1.0
      %v563 = vsub.f32 %v515, 1.0
      %v564 = vsub.f32 %v517, 1.0
      %v565 = vsub.f32 %v519, 1.0
      %v566 = vsub.f32 %v521, 1.0
      %v567 = vsub.f32 %v523, 1.0
      %v568 = vsub.f32 %v525, 1.0
      %v569 = vsub.f32 %v527, 1.0
      %v570 = vsub.f32 %v529, 1.0
      %v571 = vsub.f32 %v531, 1.0
      %v572 = vsub.f32 %v533, 1.0
      %v573 = vsub.f32 %v535, 1.0
      %v574 = vsub.f32 %v537, 1.0
      %v575 = vsub.f32 %v539, 1.0
      %v576 = vsub.f32 %v541, 1.0
      %v577 = vsub.f32 %v543, 1.0
      %v578 = vsub.f32 %v545, 1.0
      %v579 = vsub.f32 %v547, 1.0
      %v580 = vsel %vm420, %v262, %v548
      %v581 = vsel %vm421, %v267, %v549
      %v582 = vsel %vm422, %v272, %v550
      %v583 = vsel %vm423, %v277, %v551
      %v584 = vsel %vm424, %v282, %v552
      %v585 = vsel %vm425, %v287, %v553
      %v586 = vsel %vm426, %v292, %v554
      %v587 = vsel %vm427, %v297, %v555
      %v588 = vsel %vm428, %v302, %v556
      %v589 = vsel %vm429, %v307, %v557
      %v590 = vsel %vm430, %v312, %v558
      %v591 = vsel %vm431, %v317, %v559
      %v592 = vsel %vm432, %v322, %v560
      %v593 = vsel %vm433, %v327, %v561
      %v594 = vsel %vm434, %v332, %v562
      %v595 = vsel %vm435, %v337, %v563
      %v596 = vsel %vm436, %v342, %v564
      %v597 = vsel %vm437, %v347, %v565
      %v598 = vsel %vm438, %v352, %v566
      %v599 = vsel %vm439, %v357, %v567
      %v600 = vsel %vm440, %v362, %v568
      %v601 = vsel %vm441, %v367, %v569
      %v602 = vsel %vm442, %v372, %v570
      %v603 = vsel %vm443, %v377, %v571
      %v604 = vsel %vm444, %v382, %v572
      %v605 = vsel %vm445, %v387, %v573
      %v606 = vsel %vm446, %v392, %v574
      %v607 = vsel %vm447, %v397, %v575
      %v608 = vsel %vm448, %v402, %v576
      %v609 = vsel %vm449, %v407, %v577
      %v610 = vsel %vm450, %v412, %v578
      %v611 = vsel %vm451, %v417, %v579
      %612 = vst [vmem:[%s145] sm:$0xff] %v580
      %613 = vst [vmem:[%s145 + $0x8] sm:$0xff] %v581
      %614 = vst [vmem:[%s145 + $0x10] sm:$0xff] %v582
      %615 = vst [vmem:[%s145 + $0x18] sm:$0xff] %v583
      %616 = vst [vmem:[%s145 + $0x20] sm:$0xff] %v584
      %617 = vst [vmem:[%s145 + $0x28] sm:$0xff] %v585
      %618 = vst [vmem:[%s145 + $0x30] sm:$0xff] %v586
      %619 = vst [vmem:[%s145 + $0x38] sm:$0xff] %v587
      %620 = vst [vmem:[%s145 + $0x40] sm:$0xff] %v588
      %621 = vst [vmem:[%s145 + $0x48] sm:$0xff] %v589
      %622 = vst [vmem:[%s145 + $0x50] sm:$0xff] %v590
      %623 = vst [vmem:[%s145 + $0x58] sm:$0xff] %v591
      %624 = vst [vmem:[%s145 + $0x60] sm:$0xff] %v592
      %625 = vst [vmem:[%s145 + $0x68] sm:$0xff] %v593
      %626 = vst [vmem:[%s145 + $0x70] sm:$0xff] %v594
      %627 = vst [vmem:[%s145 + $0x78] sm:$0xff] %v595
      %628 = vst [vmem:[%s145 + $0x80] sm:$0xff] %v596
      %629 = vst [vmem:[%s145 + $0x88] sm:$0xff] %v597
      %630 = vst [vmem:[%s145 + $0x90] sm:$0xff] %v598
      %631 = vst [vmem:[%s145 + $0x98] sm:$0xff] %v599
      %632 = vst [vmem:[%s145 + $0xa0] sm:$0xff] %v600
      %633 = vst [vmem:[%s145 + $0xa8] sm:$0xff] %v601
      %634 = vst [vmem:[%s145 + $0xb0] sm:$0xff] %v602
      %635 = vst [vmem:[%s145 + $0xb8] sm:$0xff] %v603
      %636 = vst [vmem:[%s145 + $0xc0] sm:$0xff] %v604
      %637 = vst [vmem:[%s145 + $0xc8] sm:$0xff] %v605
      %638 = vst [vmem:[%s145 + $0xd0] sm:$0xff] %v606
      %639 = vst [vmem:[%s145 + $0xd8] sm:$0xff] %v607
      %640 = vst [vmem:[%s145 + $0xe0] sm:$0xff] %v608
      %641 = vst [vmem:[%s145 + $0xe8] sm:$0xff] %v609
      %642 = vst [vmem:[%s145 + $0xf0] sm:$0xff] %v610
      %643 = vst [vmem:[%s145 + $0xf8] sm:$0xff] %v611
      %s644 = smul.u32 32, %s13
      %p645 = scmp.lt.s32.totalorder %s644, 63
      %s646 = scalar_select %p645, %s644, 63
      %s647 = smul.addr %s646, 8
      %s648 = scalar_lea.vmem %s2, %s647
      // Predicated region
      $region29: #{upconv_forward.1} parent=27 // pred_check
        %p649 = pneg %p78
      $region30: #{upconv_forward.1} parent=27 // pred_check_branch
        %651 = sbr.rel (%p649) target = $region32
      $region31: #{upconv_forward.1} parent=27 // pred_region
        %s652 = smul.u32 32, %s13
      $region32: #{upconv_forward.1} parent=27 // pred_fallthru
        _
    $region28: #{upconv_forward.1} parent=5 // pred_fallthru
      _
    %p653 = scmp.le.s32.totalorder 2, %s8
    // Predicated region
    $region33: #{upconv_forward.1} parent=5 // pred_check
      %p654 = pneg %p653
    $region34: #{upconv_forward.1} parent=5 // pred_check_branch
      %656 = sbr.rel (%p654) target = $region36
    $region35: #{upconv_forward.1} parent=5 // pred_region
      %s657 = ssub.s32 %s8, 2
      // Predicated region
      $region37: #{upconv_forward.1} parent=35 // pred_check
        %p658 = pneg %p84
      $region38: #{upconv_forward.1} parent=35 // pred_check_branch
        %660 = sbr.rel (%p658) target = $region40
      $region39: #{upconv_forward.1} parent=35 // pred_region
        %s661 = smul.u32 32, %s14
        %p662 = scmp.lt.s32.totalorder %s661, 63
        %s663 = scalar_select %p662, %s661, 63
        %s664 = smul.addr %s663, 8
        %s665 = scalar_lea.vmem %s2, %s664
      $region40: #{upconv_forward.1} parent=35 // pred_fallthru
        _
    $region36: #{upconv_forward.1} parent=5 // pred_fallthru
      _
  $region6: #{upconv_forward.1} parent=0 // loop_footer
    %s12 = sadd.s32 1, %s8
  $region7: #{upconv_forward.1} parent=0 // loop_footer_branch
    %7 = sbr.rel target = $region3
  $region8: #{upconv_forward.1} parent=0 // loop_exit
    _

</llo_original>
